<compile_context>
chip_gen: v5e
topology: v5e:2x2
jax: 0.10.0
libtpu: 0.0.40
codegen_flags: <defaults>
</compile_context>

<pallas_src>
import functools
import math

import jax
import jax.numpy as jnp
from jax.experimental import pallas as pl
from jax.experimental.pallas import tpu as pltpu


def _round_up(x, m):
    return ((x + m - 1) // m) * m


def _pick_tile(n, candidates):
    for c in candidates:
        if c <= n and n % c == 0:
            return c
    return n


# ---------------------------------------------------------------------------
# Kernel 1: fused feature transform for all branches
#   H0[:, k*F:(k+1)*F] = tanh(features @ W_k)   (branches concatenated on lanes)
#   grid = (row tiles [parallel], in_features K-tiles [arbitrary/reduction])
# ---------------------------------------------------------------------------
def transform_kernel(feat_ref, w_ref, out_ref, acc_ref, *, active):
    kf = pl.program_id(1)

    @pl.when(kf == 0)
    def _():
        acc_ref[...] = jnp.zeros_like(acc_ref)

    acc_ref[...] += jnp.dot(feat_ref[...], w_ref[...],
                            preferred_element_type=jnp.float32)

    @pl.when(kf == pl.num_programs(1) - 1)
    def _():
        h = acc_ref[...]
        if active:
            h = jnp.tanh(h)                  # tanh on the f32 accumulator
        out_ref[...] = h.astype(out_ref.dtype)


def fused_transform(feat, w_cat, *, tm, tkf, active, out_dtype):
    np_, f_in_p = feat.shape
    fp = w_cat.shape[1]
    kern = functools.partial(transform_kernel, active=active)
    return pl.pallas_call(
        kern,
        grid=(np_ // tm, f_in_p // tkf),
        in_specs=[
            pl.BlockSpec((tm, tkf), lambda i, k: (i, k)),
            pl.BlockSpec((tkf, fp), lambda i, k: (k, 0)),   # weight K-slab
        ],
        out_specs=pl.BlockSpec((tm, fp), lambda i, k: (i, 0)),
        out_shape=jax.ShapeDtypeStruct((np_, fp), out_dtype),
        scratch_shapes=[pltpu.VMEM((tm, fp), jnp.float32)],
        compiler_params=pltpu.CompilerParams(
            dimension_semantics=("parallel", "arbitrary")),
    )(feat, w_cat)


# ---------------------------------------------------------------------------
# Kernel 2: one propagation hop for all branches at once:  H <- adj @ H
#   grid = (row tiles [parallel], adj column K-tiles [arbitrary/reduction])
#   Also emits per-row-tile column sums (for the branch means).
# ---------------------------------------------------------------------------
def hop_kernel(adj_ref, h_ref, out_ref, colsum_ref, acc_ref):
    k = pl.program_id(1)

    @pl.when(k == 0)
    def _():
        acc_ref[...] = jnp.zeros_like(acc_ref)

    acc_ref[...] += jnp.dot(adj_ref[...], h_ref[...],
                            preferred_element_type=jnp.float32)

    @pl.when(k == pl.num_programs(1) - 1)
    def _():
        acc = acc_ref[...]
        out_ref[...] = acc.astype(out_ref.dtype)
        colsum_ref[...] = jnp.sum(acc, axis=0, keepdims=True).reshape(colsum_ref.shape)


def hop_pass(adj, h, *, tm, tk, out_dtype):
    np_, fp = h.shape
    n_i, n_k = np_ // tm, np_ // tk
    out, colsum = pl.pallas_call(
        hop_kernel,
        grid=(n_i, n_k),
        in_specs=[
            pl.BlockSpec((tm, tk), lambda i, k: (i, k)),   # adj tile (streamed once/hop)
            pl.BlockSpec((tk, fp), lambda i, k: (k, 0)),   # matching H rows (lane-dense)
        ],
        out_specs=[
            pl.BlockSpec((tm, fp), lambda i, k: (i, 0)),
            pl.BlockSpec((1, 1, fp), lambda i, k: (i, 0, 0)),
        ],
        out_shape=[
            jax.ShapeDtypeStruct((np_, fp), out_dtype),
            jax.ShapeDtypeStruct((n_i, 1, fp), jnp.float32),
        ],
        scratch_shapes=[pltpu.VMEM((tm, fp), jnp.float32)],
        compiler_params=pltpu.CompilerParams(
            dimension_semantics=("parallel", "arbitrary")),
    )(adj, h)
    return out, colsum


# ---------------------------------------------------------------------------
# Kernel 3: fused attention-weighted combine (+ bias), tiled over rows.
#   out = sum_k H^(k+1)[:, k*F:(k+1)*F] * attn[k] + sum_k bias_k * attn[k]
# ---------------------------------------------------------------------------
def combine_kernel(*refs, order, f_out):
    h_refs = refs[:order]
    svec_ref, brow_ref, out_ref = refs[order], refs[order + 1], refs[order + 2]
    svec = svec_ref[...].astype(jnp.float32)            # [1, Fp] attention weights
    acc = jnp.zeros(out_ref.shape, jnp.float32)
    for k in range(order):                              # static unroll over branches
        hk = h_refs[k][...][:, k * f_out:(k + 1) * f_out].astype(jnp.float32)
        acc = acc + hk * svec[:, k * f_out:(k + 1) * f_out]
    out_ref[...] = (acc + brow_ref[...].astype(jnp.float32)).astype(out_ref.dtype)


def fused_combine(hs, svec, brow, *, tm, order, f_out):
    np_, fp = hs[0].shape
    kern = functools.partial(combine_kernel, order=order, f_out=f_out)
    in_specs = ([pl.BlockSpec((tm, fp), lambda i: (i, 0)) for _ in range(order)]
                + [pl.BlockSpec((1, fp), lambda i: (0, 0)),
                   pl.BlockSpec((1, f_out), lambda i: (0, 0))])
    # Final store is f_out wide (module output shape) — narrow but tiny vs. the hop passes.
    return pl.pallas_call(
        kern,
        grid=(np_ // tm,),
        in_specs=in_specs,
        out_specs=pl.BlockSpec((tm, f_out), lambda i: (i, 0)),
        out_shape=jax.ShapeDtypeStruct((np_, f_out), jnp.float32),
        compiler_params=pltpu.CompilerParams(dimension_semantics=("parallel",)),
    )(*hs, svec, brow)


# ---------------------------------------------------------------------------
# GraphConvolution wrapper (glue in plain JAX)
# ---------------------------------------------------------------------------
def graph_convolution(adj, features, params, order=3, active=True,
                      compute_dtype=jnp.float32):
    n, f_in = features.shape
    f_out = params["ngnn_w"][0].shape[1]
    f_cat = order * f_out
    fp = _round_up(f_cat, 128)          # lane-dense concatenated feature width
    np_ = _round_up(n, 128)             # node count padded so every tile is (8,128)-aligned
    f_in_p = _round_up(f_in, 128)       # lane-dense feature / weight K axis

    # Tiles: row tile (parallel axis), K tile over adj columns, K tile over in_features.
    # Block footprints at tm=tk=512, fp=128 (f32): adj 1 MiB, H 256 KiB, acc 256 KiB —
    # fits the 32 MiB scoped VMEM default with double buffering even on v7x.
    tm = _pick_tile(np_, (512, 256, 128))
    tk = _pick_tile(np_, (512, 256, 128))
    tkf = _pick_tile(f_in_p, (512, 256, 128))

    # Pack all branch weights into one lane-dense [F_in_p, fp] slab so that
    # (a) features @ W_cat is a single wide matmul, and
    # (b) every hop is one adj @ [h_b1|h_b2|...] with >=128 output lanes.
    w_cat = jnp.zeros((f_in_p, fp), jnp.float32)
    w_cat = w_cat.at[:f_in, :f_cat].set(jnp.concatenate(params["ngnn_w"], axis=1))
    b_stack = jnp.stack(params["ngnn_b"], axis=0)                 # [order, F_out]

    feat_p = jnp.zeros((np_, f_in_p), jnp.float32).at[:n, :f_in].set(features)
    adj_p = jnp.zeros((np_, np_), jnp.float32).at[:n, :n].set(adj)

    feat_c = feat_p.astype(compute_dtype)
    adj_c = adj_p.astype(compute_dtype)   # bf16 halves adj HBM/VMEM footprint if requested
    w_c = w_cat.astype(compute_dtype)

    # TODO(synk): for large N with ~10%-dense adj, switch hop_pass to block-sparse
    #             streaming (PrefetchScalarGridSpec + per-row-tile nonzero block lists).

    # 1) fused per-branch feature transform (+ tanh), K-tiled over in_features.
    h = fused_transform(feat_c, w_c, tm=tm, tkf=tkf, active=active,
                        out_dtype=compute_dtype)

    # 2) hop passes: after pass k, branch k's columns hold its final propagation.
    hs, means = [], []
    for k in range(order):
        h, colsum = hop_pass(adj_c, h, tm=tm, tk=tk, out_dtype=compute_dtype)
        hs.append(h)
        mean_k = colsum.sum(axis=(0, 1))[k * f_out:(k + 1) * f_out] / n
        means.append(mean_k + params["ngnn_b"][k])
    means = jnp.stack(means, axis=0)                              # [order, F_out], f32

    # 3) attention MLP on the tiny [order, F_out] matrix in plain JAX (sub-vreg sized).
    a = jnp.maximum(means @ params["w1"] + params["b1"], 0.0)
    logits = a @ params["w2"] + params["b2"]
    attn = jax.nn.softmax(logits, axis=0)                         # softmax over branch axis

    # 4) fused weighted combine (bias folded in) — no [order, N, F_out] stack in HBM.
    svec = jnp.zeros((1, fp), jnp.float32).at[0, :f_cat].set(attn.reshape(-1))
    brow = jnp.sum(b_stack * attn, axis=0).reshape(1, f_out)
    out = fused_combine(hs, svec, brow, tm=tm, order=order, f_out=f_out)
    return out[:n]


# ---------------------------------------------------------------------------
# Deterministic parameter init (same shapes / init style as the PyTorch module)
# ---------------------------------------------------------------------------
def init_params(key, in_features, out_features, reduction=4, order=3):
    hidden = out_features // reduction
    keys = jax.random.split(key, 2 * order + 4)
    xav = math.sqrt(6.0 / (in_features + out_features))    # xavier_uniform_
    stdv = 1.0 / math.sqrt(out_features)
    ngnn_w = [jax.random.uniform(keys[i], (in_features, out_features),
                                 minval=-xav, maxval=xav, dtype=jnp.float32)
              for i in range(order)]
    ngnn_b = [jax.random.uniform(keys[order + i], (out_features,),
                                 minval=-stdv, maxval=stdv, dtype=jnp.float32)
              for i in range(order)]
    k1, k2, k3, k4 = keys[2 * order: 2 * order + 4]
    s1 = 1.0 / math.sqrt(out_features)
    s2 = 1.0 / math.sqrt(hidden)
    # fc weights stored pre-transposed: y = x @ W + b
    w1 = jax.random.uniform(k1, (out_features, hidden), minval=-s1, maxval=s1, dtype=jnp.float32)
    b1 = jax.random.uniform(k2, (hidden,), minval=-s1, maxval=s1, dtype=jnp.float32)
    w2 = jax.random.uniform(k3, (hidden, out_features), minval=-s2, maxval=s2, dtype=jnp.float32)
    b2 = jax.random.uniform(k4, (out_features,), minval=-s2, maxval=s2, dtype=jnp.float32)
    return {"ngnn_w": ngnn_w, "ngnn_b": ngnn_b, "w1": w1, "b1": b1, "w2": w2, "b2": b2}


# Pure-JAX reference for verification
def reference(adj, features, params, order=3, active=True):
    abstract = []
    for i in range(order):
        h = features @ params["ngnn_w"][i]
        if active:
            h = jnp.tanh(h)
        for _ in range(i + 1):
            h = adj @ h
        abstract.append(h + params["ngnn_b"][i])
    means = jnp.stack([a.mean(axis=0) for a in abstract], axis=0)
    h = jnp.maximum(means @ params["w1"] + params["b1"], 0.0)
    logits = h @ params["w2"] + params["b2"]
    attn = jax.nn.softmax(logits, axis=0)
    out = abstract[0] * attn[0]
    for i in range(1, order):
        out = out + abstract[i] * attn[i]
    return out


if __name__ == "__main__":
    N, F_in, F_out = 64, 32, 32     # small shapes consistent with the module
    key = jax.random.PRNGKey(0)
    k_feat, k_adj, k_param = jax.random.split(key, 3)

    features = jax.random.normal(k_feat, (N, F_in), dtype=jnp.float32)

    # deterministic symmetric row-normalized adjacency with self-loops
    a = (jax.random.uniform(k_adj, (N, N)) < 0.1).astype(jnp.float32)
    a = jnp.maximum(a, a.T) + jnp.eye(N, dtype=jnp.float32)
    adj = a / jnp.sum(a, axis=1, keepdims=True)

    params = init_params(k_param, F_in, F_out, reduction=4, order=3)

    ref = reference(adj, features, params, order=3, active=True)

    # f32 path: strict check against the pure-JAX reference
    out = graph_convolution(adj, features, params, order=3, active=True,
                            compute_dtype=jnp.float32)
    out = jax.block_until_ready(out)
    assert out.shape == (N, F_out)
    assert jnp.allclose(out, ref, atol=1e-4, rtol=1e-4), "f32 Pallas kernel mismatch vs reference"

    # bf16 MXU-operand path (f32 accumulation): loose tolerance
    out_bf16 = graph_convolution(adj, features, params, order=3, active=True,
                                 compute_dtype=jnp.bfloat16)
    out_bf16 = jax.block_until_ready(out_bf16)
    err = float(jnp.max(jnp.abs(out_bf16.astype(jnp.float32) - ref)))
    assert err < 5e-2, f"bf16 Pallas kernel drifted too far: {err}"

    print("KERNEL_OK")
</pallas_src>

<mosaic_0001>
module attributes {stable_mosaic.version = 11 : i64} {
  func.func @transform_kernel(%arg0: i32, %arg1: i32, %arg2: memref<128x128xf32, #tpu.memory_space<vmem>>, %arg3: memref<128x128xf32, #tpu.memory_space<vmem>>, %arg4: memref<128x128xf32, #tpu.memory_space<vmem>>, %arg5: memref<128x128xf32, #tpu.memory_space<vmem>>) attributes {dimension_semantics = [#tpu.dimension_semantics<parallel>, #tpu.dimension_semantics<arbitrary>], iteration_bounds = array<i64: 1, 1>, scalar_prefetch = 0 : i64, scratch_operands = 1 : i64, tpu.core_type = #tpu.core_type<tc>, window_params = [{transform_indices = @transform_0, window_bounds = array<i64: 128, 128>}, {transform_indices = @transform_1, window_bounds = array<i64: 128, 128>}, {transform_indices = @transform_2, window_bounds = array<i64: 128, 128>}]} {
    %c0_i32 = arith.constant 0 : i32
    %0 = arith.cmpi eq, %arg1, %c0_i32 : i32
    %1 = arith.extui %0 : i1 to i32
    %c0_i32_0 = arith.constant 0 : i32
    %2 = arith.cmpi ne, %1, %c0_i32_0 : i32
    scf.if %2 {
      %cst_10 = arith.constant 0.000000e+00 : f32
      %12 = vector.broadcast %cst_10 : f32 to vector<128x128xf32>
      %c0_11 = arith.constant 0 : index
      %c0_12 = arith.constant 0 : index
      %13 = vector.load %arg5[%c0_11, %c0_12] : memref<128x128xf32, #tpu.memory_space<vmem>>, vector<128x128xf32>
      tpu.vector_store %arg5[%c0_11, %c0_12], %12 {strides = array<i32>} : memref<128x128xf32, #tpu.memory_space<vmem>>, vector<128x128xf32>,
    } else {
    }
    %c0 = arith.constant 0 : index
    %c0_1 = arith.constant 0 : index
    %3 = vector.load %arg5[%c0, %c0_1] : memref<128x128xf32, #tpu.memory_space<vmem>>, vector<128x128xf32>
    %c0_2 = arith.constant 0 : index
    %c0_3 = arith.constant 0 : index
    %4 = vector.load %arg2[%c0_2, %c0_3] : memref<128x128xf32, #tpu.memory_space<vmem>>, vector<128x128xf32>
    %c0_4 = arith.constant 0 : index
    %c0_5 = arith.constant 0 : index
    %5 = vector.load %arg3[%c0_4, %c0_5] : memref<128x128xf32, #tpu.memory_space<vmem>>, vector<128x128xf32>
    %cst = arith.constant dense<0.000000e+00> : vector<128x128xf32>
    %6 = tpu.matmul %4, %5, %cst {dimension_numbers = #tpu.dot_dimension_numbers<[1], [0], [0], [1], [0, 0, 1, 1], [], []>} : vector<128x128xf32>, vector<128x128xf32>, vector<128x128xf32> -> vector<128x128xf32>
    %7 = arith.addf %3, %6 : vector<128x128xf32>
    %c0_6 = arith.constant 0 : index
    %c0_7 = arith.constant 0 : index
    %8 = vector.load %arg5[%c0_6, %c0_7] : memref<128x128xf32, #tpu.memory_space<vmem>>, vector<128x128xf32>
    tpu.vector_store %arg5[%c0_6, %c0_7], %7 {strides = array<i32>} : memref<128x128xf32, #tpu.memory_space<vmem>>, vector<128x128xf32>,
    %c0_i32_8 = arith.constant 0 : i32
    %9 = arith.cmpi eq, %arg1, %c0_i32_8 : i32
    %10 = arith.extui %9 : i1 to i32
    %c0_i32_9 = arith.constant 0 : i32
    %11 = arith.cmpi ne, %10, %c0_i32_9 : i32
    scf.if %11 {
      %c0_10 = arith.constant 0 : index
      %c0_11 = arith.constant 0 : index
      %12 = vector.load %arg5[%c0_10, %c0_11] : memref<128x128xf32, #tpu.memory_space<vmem>>, vector<128x128xf32>
      %13 = math.tanh %12 : vector<128x128xf32>
      %c0_12 = arith.constant 0 : index
      %c0_13 = arith.constant 0 : index
      %14 = vector.load %arg4[%c0_12, %c0_13] : memref<128x128xf32, #tpu.memory_space<vmem>>, vector<128x128xf32>
      tpu.vector_store %arg4[%c0_12, %c0_13], %13 {strides = array<i32>} : memref<128x128xf32, #tpu.memory_space<vmem>>, vector<128x128xf32>,
    } else {
    }
    return
  }
  func.func @transform_0(%arg0: i32, %arg1: i32) -> (i32, i32) {
    %c0_i32 = arith.constant 0 : i32
    return %arg0, %arg1 : i32, i32
  }
  func.func @transform_1(%arg0: i32, %arg1: i32) -> (i32, i32) {
    %c0_i32 = arith.constant 0 : i32
    %c0_i32_0 = arith.constant 0 : i32
    return %arg1, %c0_i32 : i32, i32
  }
  func.func @transform_2(%arg0: i32, %arg1: i32) -> (i32, i32) {
    %c0_i32 = arith.constant 0 : i32
    %c0_i32_0 = arith.constant 0 : i32
    return %arg0, %c0_i32 : i32, i32
  }
}

</mosaic_0001>

<llo_original>
// kernel: tpu_custom_call.1
$region0: #{tpu_custom_call.1}
  #allocation0 [shape = 'u32[]', space=smem, size = 0x4, offset = 0x4, fixed_abs, tag = 'smem constant byte address 0x4 - core index']
  #allocation1 [shape = 'u32[72,128]{1,0:T(1,128)}', space=vmem, size = 0x9000, scoped, tag = 'internal scratch']
  #allocation2 [shape = 'f32[128,128]{1,0:T(8,128)}', space=vmem, size = 0x10000, scoped, tag = 'scratch operand']
  %s0 = inlined_call_operand.hbm [shape: f32[128,128], index: 0, kind: input, shape index: {}]
  %s1 = inlined_call_operand.hbm [shape: f32[128,128], index: 1, kind: input, shape index: {}]
  %s2 = inlined_call_operand.hbm [shape: f32[128,128], index: 2, kind: output, shape index: {}]
  %s3 = sld [smem:[#allocation0]]
  $region34: #{tpu_custom_call.1} parent=0
    _
  %s5 = ssub.s32 1, %s3
  %s6 = scalar_select 0, %s5, %s3
  $region1: #{tpu_custom_call.1} parent=0
    #allocation3 [shape = 'u8[65536]{0}', space=vmem, size = 0x10000, scoped, tag = 'input window, operand 0, single buffered']
    #allocation4 [shape = 's32[1]{0}', space=sflag, size = 0x4, scoped, tag = 'scoped memory for tpu_custom_call.1']
    #allocation5 [shape = 's32[1]{0}', space=sflag, size = 0x4, scoped, tag = 'scoped memory for tpu_custom_call.1']
    #allocation6 [shape = 'u8[65536]{0}', space=vmem, size = 0x10000, scoped, tag = 'input window, operand 1, single buffered']
    #allocation7 [shape = 's32[1]{0}', space=sflag, size = 0x4, scoped, tag = 'scoped memory for tpu_custom_call.1']
    #allocation8 [shape = 'u8[65536]{0}', space=vmem, size = 0x10000, scoped, tag = 'output window, operand 0, single buffered']
    %7 = vsyncpa [#allocation4], 0
    %8 = vsyncpa [#allocation7], 0
    %9 = vsyncpa [#allocation5], 0
    // Predicated region
    $region2: #{tpu_custom_call.1} parent=1 // pred_check
      _
    $region3: #{tpu_custom_call.1} parent=1 // pred_check_branch
      %11 = sbr.rel (0) target = $region5
    $region4: #{tpu_custom_call.1} parent=1 // pred_region
      %13 = vsyncadd [#allocation4], 0
      %s14 = sshll.u32 %s0, 4
      %s15 = int_to_ptr.hbm [resolvable:$true] %s14
      %s16 = sshll.u32 [#allocation3], 4
      %s17 = int_to_ptr.vmem [resolvable:$true] %s16
      %22 = dma.hbm_to_vmem [thread:$0]  %s15, 2048, %s17, [#allocation4], 128, 128, 8
    $region5: #{tpu_custom_call.1} parent=1 // pred_fallthru
      _
    // Predicated region
    $region6: #{tpu_custom_call.1} parent=1 // pred_check
      _
    $region7: #{tpu_custom_call.1} parent=1 // pred_check_branch
      %24 = sbr.rel (0) target = $region9
    $region8: #{tpu_custom_call.1} parent=1 // pred_region
      %26 = vsyncadd [#allocation7], 0
      %s27 = sshll.u32 %s1, 4
      %s28 = int_to_ptr.hbm [resolvable:$true] %s27
      %s29 = sshll.u32 [#allocation6], 4
      %s30 = int_to_ptr.vmem [resolvable:$true] %s29
      %35 = dma.hbm_to_vmem [thread:$0]  %s28, 2048, %s30, [#allocation7], 128, 128, 8
    $region9: #{tpu_custom_call.1} parent=1 // pred_fallthru
      _
    // Predicated region
    $region10: #{tpu_custom_call.1} parent=1 // pred_check
      _
    $region11: #{tpu_custom_call.1} parent=1 // pred_check_branch
      %37 = sbr.rel (0) target = $region13
    $region12: #{tpu_custom_call.1} parent=1 // pred_region
      %39 = dma.done [#allocation4], 2048
    $region13: #{tpu_custom_call.1} parent=1 // pred_fallthru
      _
    // Predicated region
    $region14: #{tpu_custom_call.1} parent=1 // pred_check
      _
    $region15: #{tpu_custom_call.1} parent=1 // pred_check_branch
      %41 = sbr.rel (0) target = $region17
    $region16: #{tpu_custom_call.1} parent=1 // pred_region
      %43 = dma.done [#allocation7], 2048
    $region17: #{tpu_custom_call.1} parent=1 // pred_fallthru
      _
    %p44 = scmp.eq.s32.totalorder 0, 0
    // Predicated region
    $region18: #{tpu_custom_call.1} parent=1 // pred_check
      %p45 = pneg %p44
    $region19: #{tpu_custom_call.1} parent=1 // pred_check_branch
      %47 = sbr.rel (%p45) target = $region21
    $region20: #{tpu_custom_call.1} parent=1 // pred_region
      %48 = vst [vmem:[#allocation2] sm:$0xff] 0.0
      %49 = vst [vmem:[#allocation2 + $0x8] sm:$0xff] 0.0
      %50 = vst [vmem:[#allocation2 + $0x10] sm:$0xff] 0.0
      %51 = vst [vmem:[#allocation2 + $0x18] sm:$0xff] 0.0
      %52 = vst [vmem:[#allocation2 + $0x20] sm:$0xff] 0.0
      %53 = vst [vmem:[#allocation2 + $0x28] sm:$0xff] 0.0
      %54 = vst [vmem:[#allocation2 + $0x30] sm:$0xff] 0.0
      %55 = vst [vmem:[#allocation2 + $0x38] sm:$0xff] 0.0
      %56 = vst [vmem:[#allocation2 + $0x40] sm:$0xff] 0.0
      %57 = vst [vmem:[#allocation2 + $0x48] sm:$0xff] 0.0
      %58 = vst [vmem:[#allocation2 + $0x50] sm:$0xff] 0.0
      %59 = vst [vmem:[#allocation2 + $0x58] sm:$0xff] 0.0
      %60 = vst [vmem:[#allocation2 + $0x60] sm:$0xff] 0.0
      %61 = vst [vmem:[#allocation2 + $0x68] sm:$0xff] 0.0
      %62 = vst [vmem:[#allocation2 + $0x70] sm:$0xff] 0.0
      %63 = vst [vmem:[#allocation2 + $0x78] sm:$0xff] 0.0
    $region21: #{tpu_custom_call.1} parent=1 // pred_fallthru
      _
    %v64 = vld [vmem:[#allocation2] sm:$0xff]
    %v65 = vld [vmem:[#allocation2 + $0x8] sm:$0xff]
    %v66 = vld [vmem:[#allocation2 + $0x10] sm:$0xff]
    %v67 = vld [vmem:[#allocation2 + $0x18] sm:$0xff]
    %v68 = vld [vmem:[#allocation2 + $0x20] sm:$0xff]
    %v69 = vld [vmem:[#allocation2 + $0x28] sm:$0xff]
    %v70 = vld [vmem:[#allocation2 + $0x30] sm:$0xff]
    %v71 = vld [vmem:[#allocation2 + $0x38] sm:$0xff]
    %v72 = vld [vmem:[#allocation2 + $0x40] sm:$0xff]
    %v73 = vld [vmem:[#allocation2 + $0x48] sm:$0xff]
    %v74 = vld [vmem:[#allocation2 + $0x50] sm:$0xff]
    %v75 = vld [vmem:[#allocation2 + $0x58] sm:$0xff]
    %v76 = vld [vmem:[#allocation2 + $0x60] sm:$0xff]
    %v77 = vld [vmem:[#allocation2 + $0x68] sm:$0xff]
    %v78 = vld [vmem:[#allocation2 + $0x70] sm:$0xff]
    %v79 = vld [vmem:[#allocation2 + $0x78] sm:$0xff]
    %v80 = vld [vmem:[#allocation3] sm:$0xff]
    %v81 = vld [vmem:[#allocation3 + $0x8] sm:$0xff]
    %v82 = vld [vmem:[#allocation3 + $0x10] sm:$0xff]
    %v83 = vld [vmem:[#allocation3 + $0x18] sm:$0xff]
    %v84 = vld [vmem:[#allocation3 + $0x20] sm:$0xff]
    %v85 = vld [vmem:[#allocation3 + $0x28] sm:$0xff]
    %v86 = vld [vmem:[#allocation3 + $0x30] sm:$0xff]
    %v87 = vld [vmem:[#allocation3 + $0x38] sm:$0xff]
    %v88 = vld [vmem:[#allocation3 + $0x40] sm:$0xff]
    %v89 = vld [vmem:[#allocation3 + $0x48] sm:$0xff]
    %v90 = vld [vmem:[#allocation3 + $0x50] sm:$0xff]
    %v91 = vld [vmem:[#allocation3 + $0x58] sm:$0xff]
    %v92 = vld [vmem:[#allocation3 + $0x60] sm:$0xff]
    %v93 = vld [vmem:[#allocation3 + $0x68] sm:$0xff]
    %v94 = vld [vmem:[#allocation3 + $0x70] sm:$0xff]
    %v95 = vld [vmem:[#allocation3 + $0x78] sm:$0xff]
    %v96 = vld [vmem:[#allocation6] sm:$0xff]
    %v97 = vld [vmem:[#allocation6 + $0x8] sm:$0xff]
    %v98 = vld [vmem:[#allocation6 + $0x10] sm:$0xff]
    %v99 = vld [vmem:[#allocation6 + $0x18] sm:$0xff]
    %v100 = vld [vmem:[#allocation6 + $0x20] sm:$0xff]
    %v101 = vld [vmem:[#allocation6 + $0x28] sm:$0xff]
    %v102 = vld [vmem:[#allocation6 + $0x30] sm:$0xff]
    %v103 = vld [vmem:[#allocation6 + $0x38] sm:$0xff]
    %v104 = vld [vmem:[#allocation6 + $0x40] sm:$0xff]
    %v105 = vld [vmem:[#allocation6 + $0x48] sm:$0xff]
    %v106 = vld [vmem:[#allocation6 + $0x50] sm:$0xff]
    %v107 = vld [vmem:[#allocation6 + $0x58] sm:$0xff]
    %v108 = vld [vmem:[#allocation6 + $0x60] sm:$0xff]
    %v109 = vld [vmem:[#allocation6 + $0x68] sm:$0xff]
    %v110 = vld [vmem:[#allocation6 + $0x70] sm:$0xff]
    %v111 = vld [vmem:[#allocation6 + $0x78] sm:$0xff]
    %112 = vmatpush.msra.mxu0 %v111
    %113 = vmatpush.msra.mxu0 %v110
    %114 = vmatpush.msra.mxu0 %v109
    %115 = vmatpush.msra.mxu0 %v108
    %116 = vmatpush.msra.mxu0 %v107
    %117 = vmatpush.msra.mxu0 %v106
    %118 = vmatpush.msra.mxu0 %v105
    %119 = vmatpush.msra.mxu0 %v104
    %120 = vmatpush.msra.mxu0 %v103
    %121 = vmatpush.msra.mxu0 %v102
    %122 = vmatpush.msra.mxu0 %v101
    %123 = vmatpush.msra.mxu0 %v100
    %124 = vmatpush.msra.mxu0 %v99
    %125 = vmatpush.msra.mxu0 %v98
    %126 = vmatpush.msra.mxu0 %v97
    %127 = vmatpush.msra.mxu0 %v96
    %128 = vmatmul.f32.gmra.mxu0 %v80
    %v129 = vpop.f32.mrf.mxu0
    %v130 = vadd.f32 0.0, %v129
    %131 = vmatmul.f32.gmra.mxu0 %v81
    %v132 = vpop.f32.mrf.mxu0
    %v133 = vadd.f32 0.0, %v132
    %134 = vmatmul.f32.gmra.mxu0 %v82
    %v135 = vpop.f32.mrf.mxu0
    %v136 = vadd.f32 0.0, %v135
    %137 = vmatmul.f32.gmra.mxu0 %v83
    %v138 = vpop.f32.mrf.mxu0
    %v139 = vadd.f32 0.0, %v138
    %140 = vmatmul.f32.gmra.mxu0 %v84
    %v141 = vpop.f32.mrf.mxu0
    %v142 = vadd.f32 0.0, %v141
    %143 = vmatmul.f32.gmra.mxu0 %v85
    %v144 = vpop.f32.mrf.mxu0
    %v145 = vadd.f32 0.0, %v144
    %146 = vmatmul.f32.gmra.mxu0 %v86
    %v147 = vpop.f32.mrf.mxu0
    %v148 = vadd.f32 0.0, %v147
    %149 = vmatmul.f32.gmra.mxu0 %v87
    %v150 = vpop.f32.mrf.mxu0
    %v151 = vadd.f32 0.0, %v150
    %152 = vmatmul.f32.gmra.mxu0 %v88
    %v153 = vpop.f32.mrf.mxu0
    %v154 = vadd.f32 0.0, %v153
    %155 = vmatmul.f32.gmra.mxu0 %v89
    %v156 = vpop.f32.mrf.mxu0
    %v157 = vadd.f32 0.0, %v156
    %158 = vmatmul.f32.gmra.mxu0 %v90
    %v159 = vpop.f32.mrf.mxu0
    %v160 = vadd.f32 0.0, %v159
    %161 = vmatmul.f32.gmra.mxu0 %v91
    %v162 = vpop.f32.mrf.mxu0
    %v163 = vadd.f32 0.0, %v162
    %164 = vmatmul.f32.gmra.mxu0 %v92
    %v165 = vpop.f32.mrf.mxu0
    %v166 = vadd.f32 0.0, %v165
    %167 = vmatmul.f32.gmra.mxu0 %v93
    %v168 = vpop.f32.mrf.mxu0
    %v169 = vadd.f32 0.0, %v168
    %170 = vmatmul.f32.gmra.mxu0 %v94
    %v171 = vpop.f32.mrf.mxu0
    %v172 = vadd.f32 0.0, %v171
    %173 = vmatmul.f32.gmra.mxu0 %v95
    %v174 = vpop.f32.mrf.mxu0
    %v175 = vadd.f32 0.0, %v174
    %176 = vdwg.mxu0
    %v177 = vadd.f32 %v64, %v130
    %v178 = vadd.f32 %v65, %v133
    %v179 = vadd.f32 %v66, %v136
    %v180 = vadd.f32 %v67, %v139
    %v181 = vadd.f32 %v68, %v142
    %v182 = vadd.f32 %v69, %v145
    %v183 = vadd.f32 %v70, %v148
    %v184 = vadd.f32 %v71, %v151
    %v185 = vadd.f32 %v72, %v154
    %v186 = vadd.f32 %v73, %v157
    %v187 = vadd.f32 %v74, %v160
    %v188 = vadd.f32 %v75, %v163
    %v189 = vadd.f32 %v76, %v166
    %v190 = vadd.f32 %v77, %v169
    %v191 = vadd.f32 %v78, %v172
    %v192 = vadd.f32 %v79, %v175
    %193 = vst [vmem:[#allocation2] sm:$0xff] %v177
    %194 = vst [vmem:[#allocation2 + $0x8] sm:$0xff] %v178
    %195 = vst [vmem:[#allocation2 + $0x10] sm:$0xff] %v179
    %196 = vst [vmem:[#allocation2 + $0x18] sm:$0xff] %v180
    %197 = vst [vmem:[#allocation2 + $0x20] sm:$0xff] %v181
    %198 = vst [vmem:[#allocation2 + $0x28] sm:$0xff] %v182
    %199 = vst [vmem:[#allocation2 + $0x30] sm:$0xff] %v183
    %200 = vst [vmem:[#allocation2 + $0x38] sm:$0xff] %v184
    %201 = vst [vmem:[#allocation2 + $0x40] sm:$0xff] %v185
    %202 = vst [vmem:[#allocation2 + $0x48] sm:$0xff] %v186
    %203 = vst [vmem:[#allocation2 + $0x50] sm:$0xff] %v187
    %204 = vst [vmem:[#allocation2 + $0x58] sm:$0xff] %v188
    %205 = vst [vmem:[#allocation2 + $0x60] sm:$0xff] %v189
    %206 = vst [vmem:[#allocation2 + $0x68] sm:$0xff] %v190
    %207 = vst [vmem:[#allocation2 + $0x70] sm:$0xff] %v191
    %208 = vst [vmem:[#allocation2 + $0x78] sm:$0xff] %v192
    // Predicated region
    $region22: #{tpu_custom_call.1} parent=1 // pred_check
      %p209 = pneg %p44
    $region23: #{tpu_custom_call.1} parent=1 // pred_check_branch
      %211 = sbr.rel (%p209) target = $region25
    $region24: #{tpu_custom_call.1} parent=1 // pred_region
      %v212 = vld [vmem:[#allocation2] sm:$0xff]
      %v213 = vld [vmem:[#allocation2 + $0x8] sm:$0xff]
      %v214 = vld [vmem:[#allocation2 + $0x10] sm:$0xff]
      %v215 = vld [vmem:[#allocation2 + $0x18] sm:$0xff]
      %v216 = vld [vmem:[#allocation2 + $0x20] sm:$0xff]
      %v217 = vld [vmem:[#allocation2 + $0x28] sm:$0xff]
      %v218 = vld [vmem:[#allocation2 + $0x30] sm:$0xff]
      %v219 = vld [vmem:[#allocation2 + $0x38] sm:$0xff]
      %v220 = vld [vmem:[#allocation2 + $0x40] sm:$0xff]
      %v221 = vld [vmem:[#allocation2 + $0x48] sm:$0xff]
      %v222 = vld [vmem:[#allocation2 + $0x50] sm:$0xff]
      %v223 = vld [vmem:[#allocation2 + $0x58] sm:$0xff]
      %v224 = vld [vmem:[#allocation2 + $0x60] sm:$0xff]
      %v225 = vld [vmem:[#allocation2 + $0x68] sm:$0xff]
      %v226 = vld [vmem:[#allocation2 + $0x70] sm:$0xff]
      %v227 = vld [vmem:[#allocation2 + $0x78] sm:$0xff]
      %v228 = vtanh.pop %v212
      %v229 = vtanh.pop %v213
      %v230 = vtanh.pop %v214
      %v231 = vtanh.pop %v215
      %v232 = vtanh.pop %v216
      %v233 = vtanh.pop %v217
      %v234 = vtanh.pop %v218
      %v235 = vtanh.pop %v219
      %v236 = vtanh.pop %v220
      %v237 = vtanh.pop %v221
      %v238 = vtanh.pop %v222
      %v239 = vtanh.pop %v223
      %v240 = vtanh.pop %v224
      %v241 = vtanh.pop %v225
      %v242 = vtanh.pop %v226
      %v243 = vtanh.pop %v227
      %244 = vst [vmem:[#allocation8] sm:$0xff] %v228
      %245 = vst [vmem:[#allocation8 + $0x8] sm:$0xff] %v229
      %246 = vst [vmem:[#allocation8 + $0x10] sm:$0xff] %v230
      %247 = vst [vmem:[#allocation8 + $0x18] sm:$0xff] %v231
      %248 = vst [vmem:[#allocation8 + $0x20] sm:$0xff] %v232
      %249 = vst [vmem:[#allocation8 + $0x28] sm:$0xff] %v233
      %250 = vst [vmem:[#allocation8 + $0x30] sm:$0xff] %v234
      %251 = vst [vmem:[#allocation8 + $0x38] sm:$0xff] %v235
      %252 = vst [vmem:[#allocation8 + $0x40] sm:$0xff] %v236
      %253 = vst [vmem:[#allocation8 + $0x48] sm:$0xff] %v237
      %254 = vst [vmem:[#allocation8 + $0x50] sm:$0xff] %v238
      %255 = vst [vmem:[#allocation8 + $0x58] sm:$0xff] %v239
      %256 = vst [vmem:[#allocation8 + $0x60] sm:$0xff] %v240
      %257 = vst [vmem:[#allocation8 + $0x68] sm:$0xff] %v241
      %258 = vst [vmem:[#allocation8 + $0x70] sm:$0xff] %v242
      %259 = vst [vmem:[#allocation8 + $0x78] sm:$0xff] %v243
    $region25: #{tpu_custom_call.1} parent=1 // pred_fallthru
      _
    // Predicated region
    $region26: #{tpu_custom_call.1} parent=1 // pred_check
      _
    $region27: #{tpu_custom_call.1} parent=1 // pred_check_branch
      %261 = sbr.rel (0) target = $region29
    $region28: #{tpu_custom_call.1} parent=1 // pred_region
      %263 = vsyncadd [#allocation5], 0
      %s264 = sshll.u32 [#allocation8], 4
      %s265 = int_to_ptr.vmem [resolvable:$true] %s264
      %s266 = sshll.u32 %s2, 4
      %s267 = int_to_ptr.hbm [resolvable:$true] %s266
      %272 = dma.vmem_to_hbm [thread:$0]  %s265, 2048, %s267, [#allocation5], 128, 128, 8
    $region29: #{tpu_custom_call.1} parent=1 // pred_fallthru
      _
    // Predicated region
    $region30: #{tpu_custom_call.1} parent=1 // pred_check
      _
    $region31: #{tpu_custom_call.1} parent=1 // pred_check_branch
      %274 = sbr.rel (0) target = $region33
    $region32: #{tpu_custom_call.1} parent=1 // pred_region
      %276 = dma.done [#allocation5], 2048
    $region33: #{tpu_custom_call.1} parent=1 // pred_fallthru
      _
    %277 = vsyncpa [#allocation4], 1
    %278 = vsyncpa [#allocation7], 1
    %279 = vsyncpa [#allocation5], 1

</llo_original>
